<compile_context>
chip_gen: v7x
topology: tpu7x:2x2x1
jax: 0.10.0
libtpu: 0.0.40
codegen_flags: <defaults>
</compile_context>

<pallas_src>
import functools

import jax
import jax.numpy as jnp
from jax.experimental import pallas as pl
from jax.experimental.pallas import tpu as pltpu


def _basic_block_kernel(x_ref, w1_ref, w2_ref, o_ref, cols1_ref, cols2_ref, *,
                        imgs, H, H1, stride):
    """Fused conv3x3(stride)+ReLU -> conv3x3(1)+ReLU for `imgs` images.

    x_ref    : (imgs*H,   W*Cin)      row-packed input (channels on lanes)
    w1_ref   : (3*W*Cin,  W1*Cmid)    kh-stacked banded conv1 weights
    w2_ref   : (3*W1*Cmid, W1*Cout)   kh-stacked banded conv2 weights
    o_ref    : (imgs*H1,  W1*Cout)    row-packed output (lane-dense)
    cols1_ref: (imgs*H1,  3*W*Cin)    K-stacked conv1 LHS (VMEM scratch)
    cols2_ref: (imgs*H1,  3*W1*Cmid)  K-stacked conv2 LHS (VMEM scratch)
    """
    wc_in = x_ref.shape[1]
    wc_mid = cols2_ref.shape[1] // 3
    cdt = cols1_ref.dtype

    # ---- stage 1: build the K-stacked conv1 operand ------------------------
    # Band kh holds, for every output row r, input row r*stride + kh - 1
    # (zeros where that row falls in the H zero padding).  Only the single
    # boundary row per image/tap is zeroed -- no full-buffer memset and no
    # separate (H+2)-padded copy of the input.
    for kh in range(3):
        r0 = 1 if kh == 0 else 0                 # first valid output row
        r1 = min(H1 - 1, (H - kh) // stride)     # last valid output row
        n = r1 - r0 + 1
        src0 = r0 * stride + kh - 1              # matching first input row
        c0 = kh * wc_in
        for g in range(imgs):
            d0 = g * H1
            if r0 > 0:                           # top zero-pad row(s)
                cols1_ref[d0:d0 + r0, c0:c0 + wc_in] = jnp.zeros(
                    (r0, wc_in), cdt)
            if r1 < H1 - 1:                      # bottom zero-pad row(s)
                cols1_ref[d0 + r1 + 1:d0 + H1, c0:c0 + wc_in] = jnp.zeros(
                    (H1 - 1 - r1, wc_in), cdt)
            if stride == 1:
                rows = x_ref[g * H + src0:g * H + src0 + n, :]
            else:
                rows = x_ref[pl.ds(g * H + src0, n, stride), :]
            cols1_ref[d0 + r0:d0 + r0 + n, c0:c0 + wc_in] = rows.astype(cdt)

    # ---- stage 2: conv1 = ONE MXU dot (K = 3*W*Cin), then ReLU --------------
    mid = jnp.dot(cols1_ref[...], w1_ref[...],
                  preferred_element_type=jnp.float32)
    mid = jnp.maximum(mid, 0.0).astype(cdt)      # (imgs*H1, W1*Cmid)

    # ---- stage 3: build the K-stacked conv2 operand (stride 1, pad 1) -------
    # Center band: one aligned full-width store.  Shifted bands: per-image
    # copy with a single zeroed boundary row (conv2's H zero padding).
    cols2_ref[:, wc_mid:2 * wc_mid] = mid
    for g in range(imgs):
        d0 = g * H1
        # kh = 0: output row r reads intermediate row r - 1.
        cols2_ref[d0:d0 + 1, 0:wc_mid] = jnp.zeros((1, wc_mid), cdt)
        if H1 > 1:
            cols2_ref[d0 + 1:d0 + H1, 0:wc_mid] = mid[d0:d0 + H1 - 1, :]
            # kh = 2: output row r reads intermediate row r + 1.
            cols2_ref[d0:d0 + H1 - 1, 2 * wc_mid:3 * wc_mid] = (
                mid[d0 + 1:d0 + H1, :])
        cols2_ref[d0 + H1 - 1:d0 + H1, 2 * wc_mid:3 * wc_mid] = jnp.zeros(
            (1, wc_mid), cdt)

    # ---- stage 4: conv2 = ONE MXU dot + ReLU; lane-dense store --------------
    out = jnp.dot(cols2_ref[...], w2_ref[...],
                  preferred_element_type=jnp.float32)
    o_ref[...] = jnp.maximum(out, 0.0).astype(o_ref.dtype)


def _banded_conv_weights(w_oihw, w_in, w_out, stride):
    """Fold a 3x3 conv's kw taps, W zero-padding and W-stride into one matrix.

    Returns (3*w_in*Cin, w_out*Cout), kh-major along K, such that for a
    K-stacked row [in_row(kh=0) | in_row(kh=1) | in_row(kh=2)] (each lane-
    packed as (wi, Cin)) a single matmul reproduces conv2d(padding=1) along W.
    Padding taps that fall outside [0, w_in) simply contribute 0.
    """
    cout, cin, kh_sz, kw_sz = w_oihw.shape
    wt = jnp.transpose(w_oihw, (2, 3, 1, 0))        # (kh, kw, Cin, Cout)
    wi = jnp.arange(w_in)
    wo = jnp.arange(w_out)
    kw = jnp.arange(kw_sz)
    # sel[kw, wi, wo] = 1 iff input column wi feeds output column wo via tap kw
    sel = (wi[None, :, None] ==
           wo[None, None, :] * stride + kw[:, None, None] - 1)
    sel = sel.astype(w_oihw.dtype)
    mat = jnp.einsum("kio,hkcd->hicod", sel, wt)    # (kh, wi, Cin, wo, Cout)
    return mat.reshape(kh_sz * w_in * cin, w_out * cout)


def _pick_imgs_per_step(batch, h_out, target_rows=256):
    """Images folded into one grid step's matmul M dimension."""
    # Keep >= 2 grid steps when batch >= 2 so v7x's two TensorCores both work.
    cap = max(1, batch // 2)
    want = max(1, min(cap, target_rows // max(h_out, 1)))
    g = 1
    for d in range(1, want + 1):
        if batch % d == 0:
            g = d
    return g


@functools.partial(jax.jit, static_argnames=("stride", "compute_dtype",
                                             "out_dtype", "imgs_per_step"))
def basic_block_forward(x_nhwc, w1_oihw, w2_oihw, stride=1,
                        compute_dtype=jnp.bfloat16, out_dtype=None,
                        imgs_per_step=None):
    """BasicBlock.forward: relu(conv2(relu(conv1(x)))).

    NHWC in / NHWC out (lane-friendly boundary: only free reshapes around the
    pallas_call, no XLA transposes).  Output dtype defaults to compute_dtype.
    """
    B, H, W, Cin = x_nhwc.shape
    Cmid = w1_oihw.shape[0]
    Cout = w2_oihw.shape[0]
    assert w1_oihw.shape == (Cmid, Cin, 3, 3)
    assert w2_oihw.shape == (Cout, Cmid, 3, 3)
    out_dtype = compute_dtype if out_dtype is None else out_dtype

    H1 = (H + 2 - 3) // stride + 1       # conv1 output spatial (padding=1)
    W1 = (W + 2 - 3) // stride + 1       # conv2 keeps spatial (stride=1, pad=1)
    wc_in, wc_mid, wc_out = W * Cin, W1 * Cmid, W1 * Cout

    G = imgs_per_step if imgs_per_step is not None else _pick_imgs_per_step(B, H1)
    assert B % G == 0, (B, G)
    assert (G * H) % 8 == 0 and (G * H1) % 8 == 0, "need sublane-aligned blocks"
    M = G * H1

    # Lane-packed 2-D layout: rows = (image, h), lanes = (w, c).  Free reshape.
    x2d = x_nhwc.reshape(B * H, wc_in).astype(compute_dtype)
    w1_mat = _banded_conv_weights(w1_oihw, W, W1, stride).astype(compute_dtype)
    w2_mat = _banded_conv_weights(w2_oihw, W1, W1, 1).astype(compute_dtype)

    kernel = functools.partial(_basic_block_kernel, imgs=G, H=H, H1=H1,
                               stride=stride)

    itemsize = jnp.dtype(compute_dtype).itemsize
    cost = pl.CostEstimate(
        flops=2 * B * H1 * W1 * 9 * (Cin * Cmid + Cmid * Cout),
        transcendentals=0,
        bytes_accessed=(x2d.size * itemsize + w1_mat.size * itemsize +
                        w2_mat.size * itemsize +
                        B * H1 * wc_out * jnp.dtype(out_dtype).itemsize))

    out2d = pl.pallas_call(
        kernel,
        out_shape=jax.ShapeDtypeStruct((B * H1, wc_out), out_dtype),
        grid=(B // G,),
        in_specs=[
            pl.BlockSpec((G * H, wc_in), lambda i: (i, 0)),
            # Constant index_map -> weights are DMA'd once, not per grid step.
            pl.BlockSpec((3 * wc_in, wc_mid), lambda i: (0, 0)),
            pl.BlockSpec((3 * wc_mid, wc_out), lambda i: (0, 0)),
        ],
        out_specs=pl.BlockSpec((M, wc_out), lambda i: (i, 0)),
        scratch_shapes=[
            pltpu.VMEM((M, 3 * wc_in), compute_dtype),    # K-stacked conv1 LHS
            pltpu.VMEM((M, 3 * wc_mid), compute_dtype),   # K-stacked conv2 LHS
        ],
        compiler_params=pltpu.CompilerParams(
            dimension_semantics=("parallel",),   # grid >= 2 -> both v7x TCs busy
        ),
        cost_estimate=cost,
    )(x2d, w1_mat, w2_mat)

    return out2d.reshape(B, H1, W1, Cout)        # free reshape -> NHWC


def basic_block_forward_nchw(x_nchw, w1_oihw, w2_oihw, stride=1, **kw):
    """Thin NCHW adapter matching the PyTorch module's interface."""
    x = jnp.transpose(x_nchw, (0, 2, 3, 1))
    y = basic_block_forward(x, w1_oihw, w2_oihw, stride=stride, **kw)
    return jnp.transpose(y, (0, 3, 1, 2))


def _reference_nhwc(x_nhwc, w1_oihw, w2_oihw, stride, compute_dtype):
    """Pure-JAX (lax conv) reference, quantizing operands like the kernel."""
    dn1 = jax.lax.conv_dimension_numbers(x_nhwc.shape, w1_oihw.shape,
                                         ("NHWC", "OIHW", "NHWC"))
    x = x_nhwc.astype(compute_dtype)
    w1 = w1_oihw.astype(compute_dtype)
    w2 = w2_oihw.astype(compute_dtype)
    y = jax.lax.conv_general_dilated(
        x, w1, (stride, stride), ((1, 1), (1, 1)), dimension_numbers=dn1,
        preferred_element_type=jnp.float32)
    y = jnp.maximum(y, 0.0).astype(compute_dtype)
    dn2 = jax.lax.conv_dimension_numbers(y.shape, w2_oihw.shape,
                                         ("NHWC", "OIHW", "NHWC"))
    y = jax.lax.conv_general_dilated(
        y, w2, (1, 1), ((1, 1), (1, 1)), dimension_numbers=dn2,
        preferred_element_type=jnp.float32)
    return jnp.maximum(y, 0.0)


if __name__ == "__main__":
    # BasicBlock(inplanes=4, planes=8, stride=1) on a (2, 4, 16, 16) input.
    B, Cin, Cmid, H, W = 2, 4, 8, 16, 16
    key = jax.random.PRNGKey(0)
    kx, kw1, kw2, kx2 = jax.random.split(key, 4)

    x_nchw = jax.random.normal(kx, (B, Cin, H, W), jnp.float32)
    w1 = jax.random.normal(kw1, (Cmid, Cin, 3, 3), jnp.float32) * (2.0 / (Cin * 9)) ** 0.5
    w2 = jax.random.normal(kw2, (Cmid, Cmid, 3, 3), jnp.float32) * (2.0 / (Cmid * 9)) ** 0.5
    x_nhwc = jnp.transpose(x_nchw, (0, 2, 3, 1))

    # 1) f32 operands, stride=1, NCHW adapter: tight check of the fused
    #    K-stacked / banded formulation against lax conv.
    out = jax.block_until_ready(basic_block_forward_nchw(
        x_nchw, w1, w2, stride=1, compute_dtype=jnp.float32))
    ref = jnp.transpose(_reference_nhwc(x_nhwc, w1, w2, 1, jnp.float32),
                        (0, 3, 1, 2))
    assert out.shape == (B, Cmid, H, W), out.shape
    assert jnp.allclose(out, ref, atol=1e-4, rtol=1e-4), "f32 mismatch vs ref"

    # 2) bf16 operands (MXU-native), bf16 output, NHWC boundary (no transposes).
    out_bf = jax.block_until_ready(basic_block_forward(
        x_nhwc, w1, w2, stride=1, compute_dtype=jnp.bfloat16))
    ref_bf = _reference_nhwc(x_nhwc, w1, w2, 1, jnp.bfloat16)
    assert out_bf.dtype == jnp.bfloat16
    assert jnp.allclose(out_bf.astype(jnp.float32), ref_bf,
                        atol=3e-2, rtol=3e-2), "bf16 mismatch vs ref"

    # 3) f32, B=8, stride=2: exercises multi-image-per-step (G=4, M=32 rows
    #    per dot, 2 parallel grid steps) and the strided row taps.
    B2 = 8
    x8 = jax.random.normal(kx2, (B2, H, W, Cin), jnp.float32)
    out8 = jax.block_until_ready(basic_block_forward(
        x8, w1, w2, stride=2, compute_dtype=jnp.float32))
    ref8 = _reference_nhwc(x8, w1, w2, 2, jnp.float32)
    assert out8.shape == (B2, H // 2, W // 2, Cmid), out8.shape
    assert jnp.allclose(out8, ref8, atol=1e-4, rtol=1e-4), "stride-2 mismatch"

    print("KERNEL_OK")
</pallas_src>

<mosaic_0001>
module attributes {stable_mosaic.version = 11 : i64} {
  func.func @_basic_block_kernel(%arg0: i32, %arg1: memref<16x64xf32, #tpu.memory_space<vmem>>, %arg2: memref<192x128xf32, #tpu.memory_space<vmem>>, %arg3: memref<384x128xf32, #tpu.memory_space<vmem>>, %arg4: memref<16x128xf32, #tpu.memory_space<vmem>>, %arg5: memref<16x192xf32, #tpu.memory_space<vmem>>, %arg6: memref<16x384xf32, #tpu.memory_space<vmem>>) attributes {dimension_semantics = [#tpu.dimension_semantics<parallel>], iteration_bounds = array<i64: 2>, scalar_prefetch = 0 : i64, scratch_operands = 2 : i64, tpu.core_type = #tpu.core_type<tc>, window_params = [{transform_indices = @transform_0, window_bounds = array<i64: 16, 64>}, {pipeline_mode = #tpu.pipeline_mode<synchronous>, transform_indices = @transform_1, window_bounds = array<i64: 192, 128>}, {pipeline_mode = #tpu.pipeline_mode<synchronous>, transform_indices = @transform_2, window_bounds = array<i64: 384, 128>}, {transform_indices = @transform_3, window_bounds = array<i64: 16, 128>}]} {
    %cst = arith.constant 0.000000e+00 : f32
    %0 = vector.broadcast %cst : f32 to vector<1x64xf32>
    %c0 = arith.constant 0 : index
    %c0_0 = arith.constant 0 : index
    %1 = vector.load %arg5[%c0, %c0_0] : memref<16x192xf32, #tpu.memory_space<vmem>>, vector<1x64xf32>
    tpu.vector_store %arg5[%c0, %c0_0], %0 {strides = array<i32>} : memref<16x192xf32, #tpu.memory_space<vmem>>, vector<1x64xf32>,
    %c0_1 = arith.constant 0 : index
    %c0_2 = arith.constant 0 : index
    %2 = vector.load %arg1[%c0_1, %c0_2] : memref<16x64xf32, #tpu.memory_space<vmem>>, vector<15x64xf32>
    %c1 = arith.constant 1 : index
    %c0_3 = arith.constant 0 : index
    %3 = vector.load %arg5[%c1, %c0_3] : memref<16x192xf32, #tpu.memory_space<vmem>>, vector<15x64xf32>
    tpu.vector_store %arg5[%c1, %c0_3], %2 {strides = array<i32>} : memref<16x192xf32, #tpu.memory_space<vmem>>, vector<15x64xf32>,
    %c0_4 = arith.constant 0 : index
    %c0_5 = arith.constant 0 : index
    %4 = vector.load %arg1[%c0_4, %c0_5] : memref<16x64xf32, #tpu.memory_space<vmem>>, vector<16x64xf32>
    %c0_6 = arith.constant 0 : index
    %c64 = arith.constant 64 : index
    %5 = vector.load %arg5[%c0_6, %c64] : memref<16x192xf32, #tpu.memory_space<vmem>>, vector<16x64xf32>
    tpu.vector_store %arg5[%c0_6, %c64], %4 {strides = array<i32>} : memref<16x192xf32, #tpu.memory_space<vmem>>, vector<16x64xf32>,
    %cst_7 = arith.constant 0.000000e+00 : f32
    %6 = vector.broadcast %cst_7 : f32 to vector<1x64xf32>
    %c15 = arith.constant 15 : index
    %c128 = arith.constant 128 : index
    %7 = vector.load %arg5[%c15, %c128] : memref<16x192xf32, #tpu.memory_space<vmem>>, vector<1x64xf32>
    tpu.vector_store %arg5[%c15, %c128], %6 {strides = array<i32>} : memref<16x192xf32, #tpu.memory_space<vmem>>, vector<1x64xf32>,
    %c1_8 = arith.constant 1 : index
    %c0_9 = arith.constant 0 : index
    %8 = vector.load %arg1[%c1_8, %c0_9] : memref<16x64xf32, #tpu.memory_space<vmem>>, vector<15x64xf32>
    %c0_10 = arith.constant 0 : index
    %c128_11 = arith.constant 128 : index
    %9 = vector.load %arg5[%c0_10, %c128_11] : memref<16x192xf32, #tpu.memory_space<vmem>>, vector<15x64xf32>
    tpu.vector_store %arg5[%c0_10, %c128_11], %8 {strides = array<i32>} : memref<16x192xf32, #tpu.memory_space<vmem>>, vector<15x64xf32>,
    %c0_12 = arith.constant 0 : index
    %c0_13 = arith.constant 0 : index
    %10 = vector.load %arg5[%c0_12, %c0_13] : memref<16x192xf32, #tpu.memory_space<vmem>>, vector<16x192xf32>
    %c0_14 = arith.constant 0 : index
    %c0_15 = arith.constant 0 : index
    %11 = vector.load %arg2[%c0_14, %c0_15] : memref<192x128xf32, #tpu.memory_space<vmem>>, vector<192x128xf32>
    %cst_16 = arith.constant dense<0.000000e+00> : vector<16x128xf32>
    %12 = tpu.matmul %10, %11, %cst_16 {dimension_numbers = #tpu.dot_dimension_numbers<[1], [0], [0], [1], [0, 0, 1, 1], [], []>} : vector<16x192xf32>, vector<192x128xf32>, vector<16x128xf32> -> vector<16x128xf32>
    %cst_17 = arith.constant 0.000000e+00 : f32
    %13 = vector.broadcast %cst_17 : f32 to vector<16x128xf32>
    %14 = arith.maximumf %12, %13 : vector<16x128xf32>
    %c0_18 = arith.constant 0 : index
    %c128_19 = arith.constant 128 : index
    %15 = vector.load %arg6[%c0_18, %c128_19] : memref<16x384xf32, #tpu.memory_space<vmem>>, vector<16x128xf32>
    tpu.vector_store %arg6[%c0_18, %c128_19], %14 {strides = array<i32>} : memref<16x384xf32, #tpu.memory_space<vmem>>, vector<16x128xf32>,
    %cst_20 = arith.constant 0.000000e+00 : f32
    %16 = vector.broadcast %cst_20 : f32 to vector<1x128xf32>
    %c0_21 = arith.constant 0 : index
    %c0_22 = arith.constant 0 : index
    %17 = vector.load %arg6[%c0_21, %c0_22] : memref<16x384xf32, #tpu.memory_space<vmem>>, vector<1x128xf32>
    tpu.vector_store %arg6[%c0_21, %c0_22], %16 {strides = array<i32>} : memref<16x384xf32, #tpu.memory_space<vmem>>, vector<1x128xf32>,
    %18 = vector.extract_strided_slice %14 {offsets = [0, 0], sizes = [15, 128], strides = [1, 1]} : vector<16x128xf32> to vector<15x128xf32>
    %c1_23 = arith.constant 1 : index
    %c0_24 = arith.constant 0 : index
    %19 = vector.load %arg6[%c1_23, %c0_24] : memref<16x384xf32, #tpu.memory_space<vmem>>, vector<15x128xf32>
    tpu.vector_store %arg6[%c1_23, %c0_24], %18 {strides = array<i32>} : memref<16x384xf32, #tpu.memory_space<vmem>>, vector<15x128xf32>,
    %20 = vector.extract_strided_slice %14 {offsets = [1, 0], sizes = [15, 128], strides = [1, 1]} : vector<16x128xf32> to vector<15x128xf32>
    %c0_25 = arith.constant 0 : index
    %c256 = arith.constant 256 : index
    %21 = vector.load %arg6[%c0_25, %c256] : memref<16x384xf32, #tpu.memory_space<vmem>>, vector<15x128xf32>
    tpu.vector_store %arg6[%c0_25, %c256], %20 {strides = array<i32>} : memref<16x384xf32, #tpu.memory_space<vmem>>, vector<15x128xf32>,
    %cst_26 = arith.constant 0.000000e+00 : f32
    %22 = vector.broadcast %cst_26 : f32 to vector<1x128xf32>
    %c15_27 = arith.constant 15 : index
    %c256_28 = arith.constant 256 : index
    %23 = vector.load %arg6[%c15_27, %c256_28] : memref<16x384xf32, #tpu.memory_space<vmem>>, vector<1x128xf32>
    tpu.vector_store %arg6[%c15_27, %c256_28], %22 {strides = array<i32>} : memref<16x384xf32, #tpu.memory_space<vmem>>, vector<1x128xf32>,
    %c0_29 = arith.constant 0 : index
    %c0_30 = arith.constant 0 : index
    %24 = vector.load %arg6[%c0_29, %c0_30] : memref<16x384xf32, #tpu.memory_space<vmem>>, vector<16x384xf32>
    %c0_31 = arith.constant 0 : index
    %c0_32 = arith.constant 0 : index
    %25 = vector.load %arg3[%c0_31, %c0_32] : memref<384x128xf32, #tpu.memory_space<vmem>>, vector<384x128xf32>
    %cst_33 = arith.constant dense<0.000000e+00> : vector<16x128xf32>
    %26 = tpu.matmul %24, %25, %cst_33 {dimension_numbers = #tpu.dot_dimension_numbers<[1], [0], [0], [1], [0, 0, 1, 1], [], []>} : vector<16x384xf32>, vector<384x128xf32>, vector<16x128xf32> -> vector<16x128xf32>
    %cst_34 = arith.constant 0.000000e+00 : f32
    %27 = vector.broadcast %cst_34 : f32 to vector<16x128xf32>
    %28 = arith.maximumf %26, %27 : vector<16x128xf32>
    %c0_35 = arith.constant 0 : index
    %c0_36 = arith.constant 0 : index
    %29 = vector.load %arg4[%c0_35, %c0_36] : memref<16x128xf32, #tpu.memory_space<vmem>>, vector<16x128xf32>
    tpu.vector_store %arg4[%c0_35, %c0_36], %28 {strides = array<i32>} : memref<16x128xf32, #tpu.memory_space<vmem>>, vector<16x128xf32>,
    return
  }
  func.func @transform_0(%arg0: i32) -> (i32, i32) {
    %c0_i32 = arith.constant 0 : i32
    %c0_i32_0 = arith.constant 0 : i32
    return %arg0, %c0_i32 : i32, i32
  }
  func.func @transform_1(%arg0: i32) -> (i32, i32) {
    %c0_i32 = arith.constant 0 : i32
    %c0_i32_0 = arith.constant 0 : i32
    %c0_i32_1 = arith.constant 0 : i32
    return %c0_i32, %c0_i32_0 : i32, i32
  }
  func.func @transform_2(%arg0: i32) -> (i32, i32) {
    %c0_i32 = arith.constant 0 : i32
    %c0_i32_0 = arith.constant 0 : i32
    %c0_i32_1 = arith.constant 0 : i32
    return %c0_i32, %c0_i32_0 : i32, i32
  }
  func.func @transform_3(%arg0: i32) -> (i32, i32) {
    %c0_i32 = arith.constant 0 : i32
    %c0_i32_0 = arith.constant 0 : i32
    return %arg0, %c0_i32 : i32, i32
  }
}

</mosaic_0001>

<llo_original>
// kernel: basic_block_forward.1
$region0: #{basic_block_forward.1}
  #allocation0 [shape = 'u32[]', space=smem, size = 0x4, offset = 0x4, fixed_abs, tag = 'smem constant byte address 0x4 - core index']
  #allocation1 [shape = 'u32[144,128]{1,0:T(1,128)}', space=vmem, size = 0x12000, scoped, tag = 'internal scratch']
  #allocation2 [shape = 'f32[16,192]{1,0:T(8,128)}', space=vmem, size = 0x4000, scoped, tag = 'scratch operand']
  #allocation3 [shape = 'f32[16,384]{1,0:T(8,128)}', space=vmem, size = 0x6000, scoped, tag = 'scratch operand']
  %s0 = inlined_call_operand.vmem [shape: f32[32,64], index: 0, kind: input, shape index: {}]
  %s1 = inlined_call_operand.vmem [shape: f32[192,128], index: 1, kind: input, shape index: {}]
  %s2 = inlined_call_operand.vmem [shape: f32[384,128], index: 2, kind: input, shape index: {}]
  %s3 = inlined_call_operand.vmem [shape: f32[32,128], index: 3, kind: output, shape index: {}]
  %s4 = sld [smem:[#allocation0]]
  $region45: #{basic_block_forward.1} parent=0
    _
  %s6 = ssub.s32 1, %s4
  %s7 = scalar_select 0, %s6, %s4
  loop: start=0, step=1, limit=4
  $region2: #{basic_block_forward.1} parent=0 // loop_pre_header
    _
  $region3: #{basic_block_forward.1} parent=0 // loop_header
    %s9 = sphi 0, %s13
    %p10 = scmp.ge.s32.totalorder %s9, 4
    %s19 = sphi 0, %s21
    %s22 = sphi 0, %s19
    %s23 = sphi 0, %s22
    %s39 = sphi 0, %s23
    %s43 = sphi 0, %s43
    %s45 = sphi 0, %s43
    %s46 = sphi 0, %s45
    %s60 = sphi 0, %s46
    %s64 = sphi 0, %s64
    %s66 = sphi 0, %s64
    %s67 = sphi 0, %s66
    %s81 = sphi 0, %s67
    %s87 = sphi 0, %s89
    %s90 = sphi 0, %s87
    %s91 = sphi 0, %s90
    %s107 = sphi 0, %s91
  $region4: #{basic_block_forward.1} parent=0 // loop_header_branch
    %12 = sbr.rel (%p10) target = $region8
  $region5: #{basic_block_forward.1} parent=0 // loop_body
    %s14 = ssub.s32 %s9, 1
    %s15 = ssub.s32 %s9, 2
    %s16 = sadd.s32 %s9, 1
    %s17 = ssub.s32 %s9, %s16
    %p18 = scmp.eq.s32.totalorder %s17, 0
    %s20 = sadd.s32 %s19, 1
    %s21 = scalar_select %p18, %s19, %s20
    %p24 = pneg %p18
    %p25 = scmp.eq.s32.totalorder %s9, 1
    %p26 = por %p24, %p25
    %p27 = scmp.ne.s32.totalorder %s19, %s22
    %p28 = scmp.eq.s32.totalorder %s9, 0
    %p29 = por %p27, %p28
    %p30 = scmp.ne.s32.totalorder %s19, %s22
    %p31 = scmp.eq.s32.totalorder %s14, 1
    %p32 = por %p30, %p31
    %p33 = scmp.ne.s32.totalorder %s22, %s23
    %p34 = scmp.eq.s32.totalorder %s14, 0
    %p35 = por %p33, %p34
    %p36 = scmp.ne.s32.totalorder %s22, %s23
    %p37 = scmp.eq.s32.totalorder %s15, 1
    %p38 = por %p36, %p37
    %p40 = scmp.ne.s32.totalorder %s23, %s39
    %p41 = scmp.eq.s32.totalorder %s15, 0
    %p42 = por %p40, %p41
    %s44 = sadd.s32 %s43, 1
    %p47 = scmp.eq.s32.totalorder %s9, 1
    %p48 = scmp.ne.s32.totalorder %s43, %s45
    %p49 = scmp.eq.s32.totalorder %s9, 0
    %p50 = por %p48, %p49
    %p51 = scmp.ne.s32.totalorder %s43, %s45
    %p52 = scmp.eq.s32.totalorder %s14, 1
    %p53 = por %p51, %p52
    %p54 = scmp.ne.s32.totalorder %s45, %s46
    %p55 = scmp.eq.s32.totalorder %s14, 0
    %p56 = por %p54, %p55
    %p57 = scmp.ne.s32.totalorder %s45, %s46
    %p58 = scmp.eq.s32.totalorder %s15, 1
    %p59 = por %p57, %p58
    %p61 = scmp.ne.s32.totalorder %s46, %s60
    %p62 = scmp.eq.s32.totalorder %s15, 0
    %p63 = por %p61, %p62
    %s65 = sadd.s32 %s64, 1
    %p68 = scmp.eq.s32.totalorder %s9, 1
    %p69 = scmp.ne.s32.totalorder %s64, %s66
    %p70 = scmp.eq.s32.totalorder %s9, 0
    %p71 = por %p69, %p70
    %p72 = scmp.ne.s32.totalorder %s64, %s66
    %p73 = scmp.eq.s32.totalorder %s14, 1
    %p74 = por %p72, %p73
    %p75 = scmp.ne.s32.totalorder %s66, %s67
    %p76 = scmp.eq.s32.totalorder %s14, 0
    %p77 = por %p75, %p76
    %p78 = scmp.ne.s32.totalorder %s66, %s67
    %p79 = scmp.eq.s32.totalorder %s15, 1
    %p80 = por %p78, %p79
    %p82 = scmp.ne.s32.totalorder %s67, %s81
    %p83 = scmp.eq.s32.totalorder %s15, 0
    %p84 = por %p82, %p83
    %s85 = ssub.s32 %s9, %s16
    %p86 = scmp.eq.s32.totalorder %s85, 0
    %s88 = sadd.s32 %s87, 1
    %s89 = scalar_select %p86, %s87, %s88
    %p92 = pneg %p86
    %p93 = scmp.eq.s32.totalorder %s9, 1
    %p94 = por %p92, %p93
    %p95 = scmp.ne.s32.totalorder %s87, %s90
    %p96 = scmp.eq.s32.totalorder %s9, 0
    %p97 = por %p95, %p96
    %p98 = scmp.ne.s32.totalorder %s87, %s90
    %p99 = scmp.eq.s32.totalorder %s14, 1
    %p100 = por %p98, %p99
    %p101 = scmp.ne.s32.totalorder %s90, %s91
    %p102 = scmp.eq.s32.totalorder %s14, 0
    %p103 = por %p101, %p102
    %p104 = scmp.ne.s32.totalorder %s90, %s91
    %p105 = scmp.eq.s32.totalorder %s15, 1
    %p106 = por %p104, %p105
    %p108 = scmp.ne.s32.totalorder %s91, %s107
    %p109 = scmp.eq.s32.totalorder %s15, 0
    %p110 = por %p108, %p109
    %p111 = scmp.le.s32.totalorder 1, %s9
    %p112 = scmp.lt.s32.totalorder %s9, 3
    %p113 = pnand %p111, %p112
    %p114 = pneg %p113
    // Predicated region
    $region9: #{basic_block_forward.1} parent=5 // pred_check
      _
    $region10: #{basic_block_forward.1} parent=5 // pred_check_branch
      %116 = sbr.rel (%p113) target = $region12
    $region11: #{basic_block_forward.1} parent=5 // pred_region
      %s117 = ssub.s32 %s9, 1
      // Predicated region
      $region13: #{basic_block_forward.1} parent=11 // pred_check
        %p118 = pneg %p56
      $region14: #{basic_block_forward.1} parent=11 // pred_check_branch
        %120 = sbr.rel (%p118) target = $region16
      $region15: #{basic_block_forward.1} parent=11 // pred_region
        _
      $region16: #{basic_block_forward.1} parent=11 // pred_fallthru
        _
      // Predicated region
      $region17: #{basic_block_forward.1} parent=11 // pred_check
        %p121 = pneg %p77
      $region18: #{basic_block_forward.1} parent=11 // pred_check_branch
        %123 = sbr.rel (%p121) target = $region20
      $region19: #{basic_block_forward.1} parent=11 // pred_region
        _
      $region20: #{basic_block_forward.1} parent=11 // pred_fallthru
        _
    $region12: #{basic_block_forward.1} parent=5 // pred_fallthru
      _
    %p124 = scmp.lt.s32.totalorder %s9, 2
    // Predicated region
    $region21: #{basic_block_forward.1} parent=5 // pred_check
      %p125 = pneg %p124
    $region22: #{basic_block_forward.1} parent=5 // pred_check_branch
      %127 = sbr.rel (%p125) target = $region24
    $region23: #{basic_block_forward.1} parent=5 // pred_region
      // Predicated region
      $region25: #{basic_block_forward.1} parent=23 // pred_check
        %p128 = pneg %p29
      $region26: #{basic_block_forward.1} parent=23 // pred_check_branch
        %130 = sbr.rel (%p128) target = $region28
      $region27: #{basic_block_forward.1} parent=23 // pred_region
        %s131 = smul.u32 2, %s9
        %p132 = scmp.lt.s32.totalorder %s131, 3
        %s133 = scalar_select %p132, %s131, 3
        %s134 = smul.addr %s133, 8
        %s135 = scalar_lea.vmem %s0, %s134
        %s136 = smul.u32 2, %s9
      $region28: #{basic_block_forward.1} parent=23 // pred_fallthru
        _
    $region24: #{basic_block_forward.1} parent=5 // pred_fallthru
      _
    %p137 = scmp.le.s32.totalorder 1, %s9
    %p138 = scmp.lt.s32.totalorder %s9, 3
    %p139 = pnand %p137, %p138
    %p140 = pneg %p139
    // Predicated region
    $region29: #{basic_block_forward.1} parent=5 // pred_check
      _
    $region30: #{basic_block_forward.1} parent=5 // pred_check_branch
      %142 = sbr.rel (%p139) target = $region32
    $region31: #{basic_block_forward.1} parent=5 // pred_region
      %s143 = ssub.s32 %s9, 1
      %s144 = smul.u32 2, %s14
      %p145 = scmp.lt.s32.totalorder %s144, 3
      %s146 = scalar_select %p145, %s144, 3
      %s147 = smul.addr %s146, 8
      %s148 = scalar_lea.vmem %s0, %s147
      %p149 = pneg %p35
      %p150 = pneg %p32
      %p151 = pneg %p56
      %p152 = pneg %p53
      %p153 = pneg %p77
      %p154 = pneg %p74
      %p155 = pneg %p103
      %p156 = pneg %p100
      %s157 = smul.u32 2, %s14
      %p158 = scmp.lt.s32.totalorder %s157, 3
      %s159 = scalar_select %p158, %s157, 3
      %s160 = smul.addr %s159, 8
      %s161 = scalar_lea.vmem %s3, %s160
      %s162 = smul.u32 2, %s14
      %p163 = scmp.lt.s32.totalorder %s162, 3
      %s164 = scalar_select %p163, %s162, 3
      %s165 = smul.addr %s164, 8
      %s166 = scalar_lea.vmem %s0, %s165
      %s167 = smul.u32 2, %s14
      %s168 = smul.u32 2, %s14
      %p169 = scmp.lt.s32.totalorder %s168, 3
      %s170 = scalar_select %p169, %s168, 3
      %s171 = smul.addr %s170, 8
      %s172 = scalar_lea.vmem %s3, %s171
      %s173 = smul.u32 2, %s14
      %vm174 = vcmask 516096
      %175 = vst.msk [vmem:[#allocation2] sm:$0x1] %vm174, 0.0
      %v176 = vld [vmem:[%s166] sm:$0xff]
      %v177 = vld [vmem:[%s166 + $0x8] sm:$0x7f]
      %vm180 = vcmask 1040384
      %v181 = vrot.slane %v176, 7
      %v182 = vrot.slane %v177, 7
      %v183 = vsel %vm180, %v181, %v182
      %vm186 = vcmask 523265
      %187 = vst.msk [vmem:[#allocation2] sm:$0xfe] %vm186, %v181
      %vm188 = vcmask 523264
      %189 = vst.msk [vmem:[#allocation2 + $0x10] sm:$0xff] %vm188, %v183
      %v190 = vld [vmem:[%s166] sm:$0xff]
      %v191 = vld [vmem:[%s166 + $0x8] sm:$0xff]
      %194 = vrot.lane.b32.xlu0 %v190, 64
      %v195 = vpop.permute.xlu0 %194
      %196 = vrot.lane.b32.xlu0 %v191, 64
      %v197 = vpop.permute.xlu0 %196
      %vm200 = vcmask 1048064
      %201 = vst.msk [vmem:[#allocation2] sm:$0xff] %vm200, %v195
      %202 = vst.msk [vmem:[#allocation2 + $0x10] sm:$0xff] %vm200, %v197
      %203 = vst.msk [vmem:[#allocation2 + $0x1f] sm:$0x1] %vm174, 0.0
      %v204 = vld [vmem:[%s166 + $0x1] sm:$0xff]
      %v205 = vld [vmem:[%s166 + $0x9] sm:$0x7f]
      %206 = vst.msk [vmem:[#allocation2 + $0x8] sm:$0xff] %vm188, %v204
      %vm207 = vcmask 522240
      %208 = vst.msk [vmem:[#allocation2 + $0x18] sm:$0x7f] %vm207, %v205
      %v209 = vld [vmem:[#allocation2] sm:$0xff]
      %v210 = vld [vmem:[#allocation2 + $0x8] sm:$0xff]
      %v211 = vld [vmem:[#allocation2 + $0x10] sm:$0xff]
      %v212 = vld [vmem:[#allocation2 + $0x18] sm:$0xff]
      %v213 = vld [vmem:[%s1] sm:$0xff]
      %v214 = vld [vmem:[%s1 + $0x8] sm:$0xff]
      %v215 = vld [vmem:[%s1 + $0x10] sm:$0xff]
      %v216 = vld [vmem:[%s1 + $0x18] sm:$0xff]
      %v217 = vld [vmem:[%s1 + $0x20] sm:$0xff]
      %v218 = vld [vmem:[%s1 + $0x28] sm:$0xff]
      %v219 = vld [vmem:[%s1 + $0x30] sm:$0xff]
      %v220 = vld [vmem:[%s1 + $0x38] sm:$0xff]
      %v221 = vld [vmem:[%s1 + $0x40] sm:$0xff]
      %v222 = vld [vmem:[%s1 + $0x48] sm:$0xff]
      %v223 = vld [vmem:[%s1 + $0x50] sm:$0xff]
      %v224 = vld [vmem:[%s1 + $0x58] sm:$0xff]
      %v225 = vld [vmem:[%s1 + $0x60] sm:$0xff]
      %v226 = vld [vmem:[%s1 + $0x68] sm:$0xff]
      %v227 = vld [vmem:[%s1 + $0x70] sm:$0xff]
      %v228 = vld [vmem:[%s1 + $0x78] sm:$0xff]
      %v229 = vld [vmem:[%s1 + $0x80] sm:$0xff]
      %v230 = vld [vmem:[%s1 + $0x88] sm:$0xff]
      %v231 = vld [vmem:[%s1 + $0x90] sm:$0xff]
      %v232 = vld [vmem:[%s1 + $0x98] sm:$0xff]
      %v233 = vld [vmem:[%s1 + $0xa0] sm:$0xff]
      %v234 = vld [vmem:[%s1 + $0xa8] sm:$0xff]
      %v235 = vld [vmem:[%s1 + $0xb0] sm:$0xff]
      %v236 = vld [vmem:[%s1 + $0xb8] sm:$0xff]
      %v238 = vsel %vm188, %v210, 0
      %v241 = vsel %vm188, %v212, 0
      %243 = vmatprep.subr.mxu0 0.0
      %244 = vmatpush1.msra.mxu0 %v213
      %245 = vmatprep.subr.mxu0 0.0
      %246 = vmatpush1.msra.mxu0 %v214
      %247 = vmatprep.subr.mxu0 0.0
      %248 = vmatpush1.msra.mxu0 %v215
      %249 = vmatprep.subr.mxu0 0.0
      %250 = vmatpush1.msra.mxu0 %v216
      %251 = vmatprep.subr.mxu0 0.0
      %252 = vmatpush1.msra.mxu0 %v217
      %253 = vmatprep.subr.mxu0 0.0
      %254 = vmatpush1.msra.mxu0 %v218
      %255 = vmatprep.subr.mxu0 0.0
      %256 = vmatpush1.msra.mxu0 %v219
      %257 = vmatprep.subr.mxu0 0.0
      %258 = vmatpush1.msra.mxu0 %v220
      %259 = vmatprep.subr.mxu0 0.0
      %260 = vmatpush1.msra.mxu0 %v221
      %261 = vmatprep.subr.mxu0 0.0
      %262 = vmatpush1.msra.mxu0 %v222
      %263 = vmatprep.subr.mxu0 0.0
      %264 = vmatpush1.msra.mxu0 %v223
      %265 = vmatprep.subr.mxu0 0.0
      %266 = vmatpush1.msra.mxu0 %v224
      %267 = vmatprep.subr.mxu0 0.0
      %268 = vmatpush1.msra.mxu0 %v225
      %269 = vmatprep.subr.mxu0 0.0
      %270 = vmatpush1.msra.mxu0 %v226
      %271 = vmatprep.subr.mxu0 0.0
      %272 = vmatpush1.msra.mxu0 %v227
      %273 = vmatprep.subr.mxu0 0.0
      %274 = vmatpush1.msra.mxu0 %v228
      %275 = vmatprep.subr.mxu0 0.0
      %276 = vmatpush1.msra.mxu0 %v229
      %277 = vmatprep.subr.mxu0 0.0
      %278 = vmatpush1.msra.mxu0 %v230
      %279 = vmatprep.subr.mxu0 0.0
      %280 = vmatpush1.msra.mxu0 %v231
      %281 = vmatprep.subr.mxu0 0.0
      %282 = vmatpush1.msra.mxu0 %v232
      %283 = vmatprep.subr.mxu0 0.0
      %284 = vmatpush1.msra.mxu0 %v233
      %285 = vmatprep.subr.mxu0 0.0
      %286 = vmatpush1.msra.mxu0 %v234
      %287 = vmatprep.subr.mxu0 0.0
      %288 = vmatpush1.msra.mxu0 %v235
      %289 = vmatprep.subr.mxu0 0.0
      %290 = vmatpush1.msra.mxu0 %v236
      %291 = vmatprep.subr.mxu0 0.0
      %292 = vmatpush1.msra.mxu0 0.0
      %293 = vmatprep.subr.mxu0 0.0
      %294 = vmatpush1.msra.mxu0 0.0
      %295 = vmatprep.subr.mxu0 0.0
      %296 = vmatpush1.msra.mxu0 0.0
      %297 = vmatprep.subr.mxu0 0.0
      %298 = vmatpush1.msra.mxu0 0.0
      %299 = vmatprep.subr.mxu0 0.0
      %300 = vmatpush1.msra.mxu0 0.0
      %301 = vmatprep.subr.mxu0 0.0
      %302 = vmatpush1.msra.mxu0 0.0
      %303 = vmatprep.subr.mxu0 0.0
      %304 = vmatpush1.msra.mxu0 0.0
      %305 = vmatprep.subr.mxu0 0.0
      %306 = vmatpush1.msra.mxu0 0.0
      %307 = vmatprep.mubr.f32.mxu0 %v238
      %308 = vmatmul.mubr.f32.gmra.mrb[0].mxu0 %v209
      %v309 = vpop.f32.mrb[0].mxu0
      %v310 = vadd.f32 0.0, %v309
      %v311 = vpop.f32.mrb[0].mxu0
      %312 = vmatprep.mubr.f32.mxu0 %v241
      %313 = vmatmul.mubr.f32.gmra.mrb[0].mxu0 %v211
      %v314 = vpop.f32.mrb[0].mxu0
      %v315 = vadd.f32 0.0, %v314
      %v316 = vpop.f32.mrb[0].mxu0
      %317 = vdwg.mxu0
      %v318 = vmax.f32 %v310, 0.0
      %v319 = vmax.f32 %v315, 0.0
      %320 = vst [vmem:[#allocation3 + $0x8] sm:$0xff] %v318
      %321 = vst [vmem:[#allocation3 + $0x20] sm:$0xff] %v319
      %322 = vst [vmem:[#allocation3] sm:$0x1] 0.0
      %v325 = vrot.slane %v318, 7
      %v326 = vrot.slane %v319, 7
      %v327 = vsel %vm180, %v325, %v326
      %330 = vst [vmem:[#allocation3] sm:$0xfe] %v325
      %331 = vst [vmem:[#allocation3 + $0x18] sm:$0xff] %v327
      %vm332 = vcmask 1046528
      %v333 = vrot.slane %v318, 1
      %v334 = vrot.slane %v319, 1
      %v335 = vsel %vm332, %v333, %v334
      %338 = vst [vmem:[#allocation3 + $0x10] sm:$0xff] %v335
      %339 = vst [vmem:[#allocation3 + $0x28] sm:$0x7f] %v334
      %340 = vst [vmem:[#allocation3 + $0x2f] sm:$0x1] 0.0
      %v341 = vld [vmem:[#allocation3] sm:$0xff]
      %v342 = vld [vmem:[#allocation3 + $0x8] sm:$0xff]
      %v343 = vld [vmem:[#allocation3 + $0x10] sm:$0xff]
      %v344 = vld [vmem:[#allocation3 + $0x18] sm:$0xff]
      %v345 = vld [vmem:[#allocation3 + $0x20] sm:$0xff]
      %v346 = vld [vmem:[#allocation3 + $0x28] sm:$0xff]
      %v347 = vld [vmem:[%s2] sm:$0xff]
      %v348 = vld [vmem:[%s2 + $0x8] sm:$0xff]
      %v349 = vld [vmem:[%s2 + $0x10] sm:$0xff]
      %v350 = vld [vmem:[%s2 + $0x18] sm:$0xff]
      %v351 = vld [vmem:[%s2 + $0x20] sm:$0xff]
      %v352 = vld [vmem:[%s2 + $0x28] sm:$0xff]
      %v353 = vld [vmem:[%s2 + $0x30] sm:$0xff]
      %v354 = vld [vmem:[%s2 + $0x38] sm:$0xff]
      %v355 = vld [vmem:[%s2 + $0x40] sm:$0xff]
      %v356 = vld [vmem:[%s2 + $0x48] sm:$0xff]
      %v357 = vld [vmem:[%s2 + $0x50] sm:$0xff]
      %v358 = vld [vmem:[%s2 + $0x58] sm:$0xff]
      %v359 = vld [vmem:[%s2 + $0x60] sm:$0xff]
      %v360 = vld [vmem:[%s2 + $0x68] sm:$0xff]
      %v361 = vld [vmem:[%s2 + $0x70] sm:$0xff]
      %v362 = vld [vmem:[%s2 + $0x78] sm:$0xff]
      %v363 = vld [vmem:[%s2 + $0x80] sm:$0xff]
      %v364 = vld [vmem:[%s2 + $0x88] sm:$0xff]
      %v365 = vld [vmem:[%s2 + $0x90] sm:$0xff]
      %v366 = vld [vmem:[%s2 + $0x98] sm:$0xff]
      %v367 = vld [vmem:[%s2 + $0xa0] sm:$0xff]
      %v368 = vld [vmem:[%s2 + $0xa8] sm:$0xff]
      %v369 = vld [vmem:[%s2 + $0xb0] sm:$0xff]
      %v370 = vld [vmem:[%s2 + $0xb8] sm:$0xff]
      %v371 = vld [vmem:[%s2 + $0xc0] sm:$0xff]
      %v372 = vld [vmem:[%s2 + $0xc8] sm:$0xff]
      %v373 = vld [vmem:[%s2 + $0xd0] sm:$0xff]
      %v374 = vld [vmem:[%s2 + $0xd8] sm:$0xff]
      %v375 = vld [vmem:[%s2 + $0xe0] sm:$0xff]
      %v376 = vld [vmem:[%s2 + $0xe8] sm:$0xff]
      %v377 = vld [vmem:[%s2 + $0xf0] sm:$0xff]
      %v378 = vld [vmem:[%s2 + $0xf8] sm:$0xff]
      %v379 = vld [vmem:[%s2 + $0x100] sm:$0xff]
      %v380 = vld [vmem:[%s2 + $0x108] sm:$0xff]
      %v381 = vld [vmem:[%s2 + $0x110] sm:$0xff]
      %v382 = vld [vmem:[%s2 + $0x118] sm:$0xff]
      %v383 = vld [vmem:[%s2 + $0x120] sm:$0xff]
      %v384 = vld [vmem:[%s2 + $0x128] sm:$0xff]
      %v385 = vld [vmem:[%s2 + $0x130] sm:$0xff]
      %v386 = vld [vmem:[%s2 + $0x138] sm:$0xff]
      %v387 = vld [vmem:[%s2 + $0x140] sm:$0xff]
      %v388 = vld [vmem:[%s2 + $0x148] sm:$0xff]
      %v389 = vld [vmem:[%s2 + $0x150] sm:$0xff]
      %v390 = vld [vmem:[%s2 + $0x158] sm:$0xff]
      %v391 = vld [vmem:[%s2 + $0x160] sm:$0xff]
      %v392 = vld [vmem:[%s2 + $0x168] sm:$0xff]
      %v393 = vld [vmem:[%s2 + $0x170] sm:$0xff]
      %v394 = vld [vmem:[%s2 + $0x178] sm:$0xff]
      %395 = vmatprep.subr.mxu0 0.0
      %396 = vmatpush1.msra.mxu0 %v347
      %397 = vmatprep.subr.mxu0 0.0
      %398 = vmatpush1.msra.mxu0 %v348
      %399 = vmatprep.subr.mxu0 0.0
      %400 = vmatpush1.msra.mxu0 %v349
      %401 = vmatprep.subr.mxu0 0.0
      %402 = vmatpush1.msra.mxu0 %v350
      %403 = vmatprep.subr.mxu0 0.0
      %404 = vmatpush1.msra.mxu0 %v351
      %405 = vmatprep.subr.mxu0 0.0
      %406 = vmatpush1.msra.mxu0 %v352
      %407 = vmatprep.subr.mxu0 0.0
      %408 = vmatpush1.msra.mxu0 %v353
      %409 = vmatprep.subr.mxu0 0.0
      %410 = vmatpush1.msra.mxu0 %v354
      %411 = vmatprep.subr.mxu0 0.0
      %412 = vmatpush1.msra.mxu0 %v355
      %413 = vmatprep.subr.mxu0 0.0
      %414 = vmatpush1.msra.mxu0 %v356
      %415 = vmatprep.subr.mxu0 0.0
      %416 = vmatpush1.msra.mxu0 %v357
      %417 = vmatprep.subr.mxu0 0.0
      %418 = vmatpush1.msra.mxu0 %v358
      %419 = vmatprep.subr.mxu0 0.0
      %420 = vmatpush1.msra.mxu0 %v359
      %421 = vmatprep.subr.mxu0 0.0
      %422 = vmatpush1.msra.mxu0 %v360
      %423 = vmatprep.subr.mxu0 0.0
      %424 = vmatpush1.msra.mxu0 %v361
      %425 = vmatprep.subr.mxu0 0.0
      %426 = vmatpush1.msra.mxu0 %v362
      %427 = vmatprep.subr.mxu0 0.0
      %428 = vmatpush1.msra.mxu0 %v363
      %429 = vmatprep.subr.mxu0 0.0
      %430 = vmatpush1.msra.mxu0 %v364
      %431 = vmatprep.subr.mxu0 0.0
      %432 = vmatpush1.msra.mxu0 %v365
      %433 = vmatprep.subr.mxu0 0.0
      %434 = vmatpush1.msra.mxu0 %v366
      %435 = vmatprep.subr.mxu0 0.0
      %436 = vmatpush1.msra.mxu0 %v367
      %437 = vmatprep.subr.mxu0 0.0
      %438 = vmatpush1.msra.mxu0 %v368
      %439 = vmatprep.subr.mxu0 0.0
      %440 = vmatpush1.msra.mxu0 %v369
      %441 = vmatprep.subr.mxu0 0.0
      %442 = vmatpush1.msra.mxu0 %v370
      %443 = vmatprep.subr.mxu0 0.0
      %444 = vmatpush1.msra.mxu0 %v371
      %445 = vmatprep.subr.mxu0 0.0
      %446 = vmatpush1.msra.mxu0 %v372
      %447 = vmatprep.subr.mxu0 0.0
      %448 = vmatpush1.msra.mxu0 %v373
      %449 = vmatprep.subr.mxu0 0.0
      %450 = vmatpush1.msra.mxu0 %v374
      %451 = vmatprep.subr.mxu0 0.0
      %452 = vmatpush1.msra.mxu0 %v375
      %453 = vmatprep.subr.mxu0 0.0
      %454 = vmatpush1.msra.mxu0 %v376
      %455 = vmatprep.subr.mxu0 0.0
      %456 = vmatpush1.msra.mxu0 %v377
      %457 = vmatprep.subr.mxu0 0.0
      %458 = vmatpush1.msra.mxu0 %v378
      %459 = vmatprep.mubr.f32.mxu0 %v342
      %460 = vmatmul.mubr.f32.gmra.mrb[0].mxu0 %v341
      %v461 = vpop.f32.mrb[0].mxu0
      %v462 = vadd.f32 0.0, %v461
      %v463 = vpop.f32.mrb[0].mxu0
      %464 = vmatprep.mubr.f32.mxu0 %v345
      %465 = vmatmul.mubr.f32.gmra.mrb[0].mxu0 %v344
      %v466 = vpop.f32.mrb[0].mxu0
      %v467 = vadd.f32 0.0, %v466
      %v468 = vpop.f32.mrb[0].mxu0
      %469 = vdwg.mxu0
      %470 = vmatprep.subr.mxu0 0.0
      %471 = vmatpush1.msra.mxu0 %v379
      %472 = vmatprep.subr.mxu0 0.0
      %473 = vmatpush1.msra.mxu0 %v380
      %474 = vmatprep.subr.mxu0 0.0
      %475 = vmatpush1.msra.mxu0 %v381
      %476 = vmatprep.subr.mxu0 0.0
      %477 = vmatpush1.msra.mxu0 %v382
      %478 = vmatprep.subr.mxu0 0.0
      %479 = vmatpush1.msra.mxu0 %v383
      %480 = vmatprep.subr.mxu0 0.0
      %481 = vmatpush1.msra.mxu0 %v384
      %482 = vmatprep.subr.mxu0 0.0
      %483 = vmatpush1.msra.mxu0 %v385
      %484 = vmatprep.subr.mxu0 0.0
      %485 = vmatpush1.msra.mxu0 %v386
      %486 = vmatprep.subr.mxu0 0.0
      %487 = vmatpush1.msra.mxu0 %v387
      %488 = vmatprep.subr.mxu0 0.0
      %489 = vmatpush1.msra.mxu0 %v388
      %490 = vmatprep.subr.mxu0 0.0
      %491 = vmatpush1.msra.mxu0 %v389
      %492 = vmatprep.subr.mxu0 0.0
      %493 = vmatpush1.msra.mxu0 %v390
      %494 = vmatprep.subr.mxu0 0.0
      %495 = vmatpush1.msra.mxu0 %v391
      %496 = vmatprep.subr.mxu0 0.0
      %497 = vmatpush1.msra.mxu0 %v392
      %498 = vmatprep.subr.mxu0 0.0
      %499 = vmatpush1.msra.mxu0 %v393
      %500 = vmatprep.subr.mxu0 0.0
      %501 = vmatpush1.msra.mxu0 %v394
      %502 = vmatprep.subr.mxu0 0.0
      %503 = vmatpush1.msra.mxu0 0.0
      %504 = vmatprep.subr.mxu0 0.0
      %505 = vmatpush1.msra.mxu0 0.0
      %506 = vmatprep.subr.mxu0 0.0
      %507 = vmatpush1.msra.mxu0 0.0
      %508 = vmatprep.subr.mxu0 0.0
      %509 = vmatpush1.msra.mxu0 0.0
      %510 = vmatprep.subr.mxu0 0.0
      %511 = vmatpush1.msra.mxu0 0.0
      %512 = vmatprep.subr.mxu0 0.0
      %513 = vmatpush1.msra.mxu0 0.0
      %514 = vmatprep.subr.mxu0 0.0
      %515 = vmatpush1.msra.mxu0 0.0
      %516 = vmatprep.subr.mxu0 0.0
      %517 = vmatpush1.msra.mxu0 0.0
      %518 = vmatprep.subr.mxu0 0.0
      %519 = vmatpush1.msra.mxu0 0.0
      %520 = vmatprep.subr.mxu0 0.0
      %521 = vmatpush1.msra.mxu0 0.0
      %522 = vmatprep.subr.mxu0 0.0
      %523 = vmatpush1.msra.mxu0 0.0
      %524 = vmatprep.subr.mxu0 0.0
      %525 = vmatpush1.msra.mxu0 0.0
      %526 = vmatprep.subr.mxu0 0.0
      %527 = vmatpush1.msra.mxu0 0.0
      %528 = vmatprep.subr.mxu0 0.0
      %529 = vmatpush1.msra.mxu0 0.0
      %530 = vmatprep.subr.mxu0 0.0
      %531 = vmatpush1.msra.mxu0 0.0
      %532 = vmatprep.subr.mxu0 0.0
      %533 = vmatpush1.msra.mxu0 0.0
      %534 = vmatprep.mubr.f32.mxu0 0.0
      %535 = vmatmul.mubr.f32.gmra.mrb[0].mxu0 %v343
      %v536 = vpop.f32.mrb[0].mxu0
      %v537 = vadd.f32 %v462, %v536
      %v538 = vpop.f32.mrb[0].mxu0
      %539 = vmatprep.mubr.f32.mxu0 0.0
      %540 = vmatmul.mubr.f32.gmra.mrb[0].mxu0 %v346
      %v541 = vpop.f32.mrb[0].mxu0
      %v542 = vadd.f32 %v467, %v541
      %v543 = vpop.f32.mrb[0].mxu0
      %544 = vdwg.mxu0
      %v545 = vmax.f32 %v537, 0.0
      %v546 = vmax.f32 %v542, 0.0
      %547 = vst [vmem:[%s172] sm:$0xff] %v545
      %548 = vst [vmem:[%s172 + $0x8] sm:$0xff] %v546
      %s549 = smul.u32 2, %s14
      %p550 = scmp.lt.s32.totalorder %s549, 3
      %s551 = scalar_select %p550, %s549, 3
      %s552 = smul.addr %s551, 8
      %s553 = scalar_lea.vmem %s3, %s552
      // Predicated region
      $region33: #{basic_block_forward.1} parent=31 // pred_check
        %p554 = pneg %p100
      $region34: #{basic_block_forward.1} parent=31 // pred_check_branch
        %556 = sbr.rel (%p554) target = $region36
      $region35: #{basic_block_forward.1} parent=31 // pred_region
        %s557 = smul.u32 2, %s14
      $region36: #{basic_block_forward.1} parent=31 // pred_fallthru
        _
    $region32: #{basic_block_forward.1} parent=5 // pred_fallthru
      _
    %p558 = scmp.le.s32.totalorder 2, %s9
    // Predicated region
    $region37: #{basic_block_forward.1} parent=5 // pred_check
      %p559 = pneg %p558
    $region38: #{basic_block_forward.1} parent=5 // pred_check_branch
      %561 = sbr.rel (%p559) target = $region40
    $region39: #{basic_block_forward.1} parent=5 // pred_region
      %s562 = ssub.s32 %s9, 2
      // Predicated region
      $region41: #{basic_block_forward.1} parent=39 // pred_check
        %p563 = pneg %p106
      $region42: #{basic_block_forward.1} parent=39 // pred_check_branch
        %565 = sbr.rel (%p563) target = $region44
      $region43: #{basic_block_forward.1} parent=39 // pred_region
        %s566 = smul.u32 2, %s15
        %p567 = scmp.lt.s32.totalorder %s566, 3
        %s568 = scalar_select %p567, %s566, 3
        %s569 = smul.addr %s568, 8
        %s570 = scalar_lea.vmem %s3, %s569
      $region44: #{basic_block_forward.1} parent=39 // pred_fallthru
        _
    $region40: #{basic_block_forward.1} parent=5 // pred_fallthru
      _
  $region6: #{basic_block_forward.1} parent=0 // loop_footer
    %s13 = sadd.s32 1, %s9
  $region7: #{basic_block_forward.1} parent=0 // loop_footer_branch
    %8 = sbr.rel target = $region3
  $region8: #{basic_block_forward.1} parent=0 // loop_exit
    _

</llo_original>
